<compile_context>
chip_gen: v5e
topology: v5e:2x2
jax: 0.10.0
libtpu: 0.0.40
codegen_flags: <defaults>
</compile_context>

<pallas_src>
import math
from functools import partial

import jax
import jax.numpy as jnp
from jax.experimental import pallas as pl
from jax.experimental.pallas import tpu as pltpu


def mha_kernel(q_ref, k_ref, v_ref, wk_ref, bk_ref, wo_ref, bo_ref, o_ref,
               kp_ref, vp_ref, *, heads, d_k, seq_kv, tq):
    """Fused MHA.

    q_ref        : (1, TQ, D)  query tile for this grid step
    k_ref/v_ref  : (1, S,  D)  full keys/values for this batch element
    wk_ref/wo_ref: (D, D)      projection weights (in, out)
    bk_ref/bo_ref: (1, D)      biases
    o_ref        : (1, TQ, D)  output tile
    kp_ref/vp_ref: (S, D)      VMEM scratch caching projected K / V (compute dtype)
    """
    cdt = q_ref.dtype                       # native/compute dtype (bf16 -> bf16 MXU)
    wk = wk_ref[...]                        # keep weights in native dtype
    bk = bk_ref[...].astype(jnp.float32)    # biases added in f32

    # K/V projections: computed once per batch element (q-block 0), fused into a single
    # (2S, D) @ (D, D) matmul, cached in scratch and reused for every query block.
    @pl.when(pl.program_id(1) == 0)
    def _():
        kv = jnp.concatenate([k_ref[0], v_ref[0]], axis=0)                  # (2S, D)
        kvp = jnp.dot(kv, wk, preferred_element_type=jnp.float32) + bk      # f32 acc
        kp_ref[...] = kvp[:seq_kv].astype(cdt)
        vp_ref[...] = kvp[seq_kv:].astype(cdt)

    # Q projection for this tile; fold 1/sqrt(d_k) into q once (cheaper than scaling SxS).
    inv_sqrt_dk = 1.0 / math.sqrt(float(d_k))
    qp = jnp.dot(q_ref[0], wk, preferred_element_type=jnp.float32) + bk     # (TQ, D) f32
    qp = (qp * inv_sqrt_dk).astype(cdt)

    # Head-batched attention (no per-head Python loop, no concatenate of head outputs).
    qh = jnp.transpose(qp.reshape(tq, heads, d_k), (1, 0, 2))               # (H, TQ, dk)
    kh = jnp.transpose(kp_ref[...].reshape(seq_kv, heads, d_k), (1, 0, 2))  # (H, S,  dk)
    vh = jnp.transpose(vp_ref[...].reshape(seq_kv, heads, d_k), (1, 0, 2))  # (H, S,  dk)

    scores = jnp.einsum("hqd,hkd->hqk", qh, kh,
                        preferred_element_type=jnp.float32)                 # (H, TQ, S)

    # Numerically-stable softmax; normalization via EUP reciprocal instead of VALU divides.
    m = jnp.max(scores, axis=-1, keepdims=True)
    e = jnp.exp(scores - m)
    denom = jnp.sum(e, axis=-1, keepdims=True)
    p = e * pl.reciprocal(denom, approx=True)

    ctx = jnp.einsum("hqk,hkd->hqd", p.astype(cdt), vh,
                     preferred_element_type=jnp.float32)                    # (H, TQ, dk)
    concat = jnp.transpose(ctx, (1, 0, 2)).reshape(tq, heads * d_k).astype(cdt)

    out = (jnp.dot(concat, wo_ref[...], preferred_element_type=jnp.float32)
           + bo_ref[...].astype(jnp.float32))
    o_ref[0] = out.astype(o_ref.dtype)


def multi_head_attention(q, k, v, wk, bk, wo, bo, *, heads):
    """q, k, v: (bs, S, D); wk, wo: (D, D); bk, bo: (1, D)."""
    bs, S, D = q.shape
    assert D % heads == 0, "heads must divide d_model"
    d_k = D // heads

    # Query tile: 128 rows when the sequence allows it, otherwise the whole sequence.
    TQ = 128 if (S % 128 == 0) else S
    nq = S // TQ

    kernel = partial(mha_kernel, heads=heads, d_k=d_k, seq_kv=S, tq=TQ)

    q_spec = pl.BlockSpec((1, TQ, D), lambda b, qi: (b, qi, 0))
    kv_spec = pl.BlockSpec((1, S, D), lambda b, qi: (b, 0, 0))   # constant over qi -> no re-DMA
    w_spec = pl.BlockSpec((D, D), lambda b, qi: (0, 0))
    b_spec = pl.BlockSpec((1, D), lambda b, qi: (0, 0))
    o_spec = pl.BlockSpec((1, TQ, D), lambda b, qi: (b, qi, 0))

    return pl.pallas_call(
        kernel,
        out_shape=jax.ShapeDtypeStruct((bs, S, D), q.dtype),
        grid=(bs, nq),
        in_specs=[q_spec, kv_spec, kv_spec, w_spec, b_spec, w_spec, b_spec],
        out_specs=o_spec,
        scratch_shapes=[
            pltpu.VMEM((S, D), q.dtype),   # cached projected K
            pltpu.VMEM((S, D), q.dtype),   # cached projected V
        ],
        compiler_params=pltpu.CompilerParams(
            # batch axis parallel (megacore work for v7x's 2 TCs); q-block axis arbitrary
            # because the K/V-projection scratch carries across it.
            dimension_semantics=("parallel", "arbitrary")),
    )(q, k, v, wk, bk, wo, bo)


def mha_reference(q, k, v, wk, bk, wo, bo, *, heads):
    """Pure-JAX reference mirroring the (intended) PyTorch forward."""
    bs, S, D = q.shape
    d_k = D // heads
    qp = (q @ wk + bk).reshape(bs, S, heads, d_k).transpose(0, 2, 1, 3)
    kp = (k @ wk + bk).reshape(bs, S, heads, d_k).transpose(0, 2, 1, 3)
    vp = (v @ wk + bk).reshape(bs, S, heads, d_k).transpose(0, 2, 1, 3)
    scores = jnp.einsum("bhqd,bhkd->bhqk", qp, kp) / math.sqrt(d_k)
    attn = jax.nn.softmax(scores, axis=-1)
    out = jnp.einsum("bhqk,bhkd->bhqd", attn, vp)
    concat = out.transpose(0, 2, 1, 3).reshape(bs, S, D)
    return concat @ wo + bo


if __name__ == "__main__":
    bs, seq, d_model, heads = 2, 8, 32, 4

    key = jax.random.PRNGKey(0)
    kq, kk, kv, kwk, kbk, kwo, kbo = jax.random.split(key, 7)

    q = jax.random.normal(kq, (bs, seq, d_model), dtype=jnp.float32)
    k = jax.random.normal(kk, (bs, seq, d_model), dtype=jnp.float32)
    v = jax.random.normal(kv, (bs, seq, d_model), dtype=jnp.float32)

    # Deterministic synthetic parameters (nn.Linear(d_model, d_model) shapes, stored (in, out)).
    # q_linear / v_linear are unused in the reference forward, so they are omitted.
    bound = 1.0 / math.sqrt(d_model)
    wk = jax.random.uniform(kwk, (d_model, d_model), jnp.float32, -bound, bound)
    bk = jax.random.uniform(kbk, (1, d_model), jnp.float32, -bound, bound)
    wo = jax.random.uniform(kwo, (d_model, d_model), jnp.float32, -bound, bound)
    bo = jax.random.uniform(kbo, (1, d_model), jnp.float32, -bound, bound)

    ref = mha_reference(q, k, v, wk, bk, wo, bo, heads=heads)

    # f32 path (approx reciprocal in the softmax -> slightly loosened tolerance).
    out = multi_head_attention(q, k, v, wk, bk, wo, bo, heads=heads)
    out = jax.block_until_ready(out)
    assert out.shape == (bs, seq, d_model)
    assert jnp.allclose(out, ref, atol=1e-2, rtol=1e-2), "f32 mismatch vs reference"

    # bf16 path: matmul operands stay bf16 (native MXU rate), f32 accumulation in-kernel.
    bf16 = lambda a: a.astype(jnp.bfloat16)
    out_bf16 = multi_head_attention(bf16(q), bf16(k), bf16(v),
                                    bf16(wk), bk, bf16(wo), bo, heads=heads)
    out_bf16 = jax.block_until_ready(out_bf16)
    assert out_bf16.dtype == jnp.bfloat16
    assert jnp.allclose(out_bf16.astype(jnp.float32), ref, atol=1e-1, rtol=1e-1), \
        "bf16 mismatch vs reference"

    print("KERNEL_OK")
</pallas_src>

<mosaic_0001>
module attributes {stable_mosaic.version = 11 : i64} {
  func.func @mha_kernel(%arg0: i32, %arg1: i32, %arg2: memref<1x8x32xf32, #tpu.memory_space<vmem>>, %arg3: memref<1x8x32xf32, #tpu.memory_space<vmem>>, %arg4: memref<1x8x32xf32, #tpu.memory_space<vmem>>, %arg5: memref<32x32xf32, #tpu.memory_space<vmem>>, %arg6: memref<1x32xf32, #tpu.memory_space<vmem>>, %arg7: memref<32x32xf32, #tpu.memory_space<vmem>>, %arg8: memref<1x32xf32, #tpu.memory_space<vmem>>, %arg9: memref<1x8x32xf32, #tpu.memory_space<vmem>>, %arg10: memref<8x32xf32, #tpu.memory_space<vmem>>, %arg11: memref<8x32xf32, #tpu.memory_space<vmem>>) attributes {dimension_semantics = [#tpu.dimension_semantics<parallel>, #tpu.dimension_semantics<arbitrary>], iteration_bounds = array<i64: 2, 1>, scalar_prefetch = 0 : i64, scratch_operands = 2 : i64, tpu.core_type = #tpu.core_type<tc>, window_params = [{transform_indices = @transform_0, window_bounds = array<i64: 1, 8, 32>}, {transform_indices = @transform_1, window_bounds = array<i64: 1, 8, 32>}, {transform_indices = @transform_2, window_bounds = array<i64: 1, 8, 32>}, {pipeline_mode = #tpu.pipeline_mode<synchronous>, transform_indices = @transform_3, window_bounds = array<i64: 32, 32>}, {pipeline_mode = #tpu.pipeline_mode<synchronous>, transform_indices = @transform_4, window_bounds = array<i64: 1, 32>}, {pipeline_mode = #tpu.pipeline_mode<synchronous>, transform_indices = @transform_5, window_bounds = array<i64: 32, 32>}, {pipeline_mode = #tpu.pipeline_mode<synchronous>, transform_indices = @transform_6, window_bounds = array<i64: 1, 32>}, {transform_indices = @transform_7, window_bounds = array<i64: 1, 8, 32>}]} {
    %c0 = arith.constant 0 : index
    %c0_0 = arith.constant 0 : index
    %0 = vector.load %arg5[%c0, %c0_0] : memref<32x32xf32, #tpu.memory_space<vmem>>, vector<32x32xf32>
    %c0_1 = arith.constant 0 : index
    %c0_2 = arith.constant 0 : index
    %1 = vector.load %arg6[%c0_1, %c0_2] : memref<1x32xf32, #tpu.memory_space<vmem>>, vector<1x32xf32>
    %c0_i32 = arith.constant 0 : i32
    %2 = arith.cmpi eq, %arg1, %c0_i32 : i32
    %3 = arith.extui %2 : i1 to i32
    %c0_i32_3 = arith.constant 0 : i32
    %4 = arith.cmpi ne, %3, %c0_i32_3 : i32
    scf.if %4 {
      %c0_24 = arith.constant 0 : index
      %c0_25 = arith.constant 0 : index
      %c0_26 = arith.constant 0 : index
      %42 = vector.load %arg3[%c0_24, %c0_25, %c0_26] : memref<1x8x32xf32, #tpu.memory_space<vmem>>, vector<1x8x32xf32>
      %43 = vector.shape_cast %42 : vector<1x8x32xf32> to vector<8x32xf32>
      %c0_27 = arith.constant 0 : index
      %c0_28 = arith.constant 0 : index
      %c0_29 = arith.constant 0 : index
      %44 = vector.load %arg4[%c0_27, %c0_28, %c0_29] : memref<1x8x32xf32, #tpu.memory_space<vmem>>, vector<1x8x32xf32>
      %45 = vector.shape_cast %44 : vector<1x8x32xf32> to vector<8x32xf32>
      %46 = tpu.concatenate %43, %45 in 0 : vector<8x32xf32>, vector<8x32xf32> -> vector<16x32xf32>
      %cst_30 = arith.constant dense<0.000000e+00> : vector<16x32xf32>
      %47 = tpu.matmul %46, %0, %cst_30 {dimension_numbers = #tpu.dot_dimension_numbers<[1], [0], [0], [1], [0, 0, 1, 1], [], []>} : vector<16x32xf32>, vector<32x32xf32>, vector<16x32xf32> -> vector<16x32xf32>
      %48 = vector.broadcast %1 : vector<1x32xf32> to vector<16x32xf32>
      %49 = arith.addf %47, %48 : vector<16x32xf32>
      %50 = vector.extract_strided_slice %49 {offsets = [0, 0], sizes = [8, 32], strides = [1, 1]} : vector<16x32xf32> to vector<8x32xf32>
      %c0_31 = arith.constant 0 : index
      %c0_32 = arith.constant 0 : index
      %51 = vector.load %arg10[%c0_31, %c0_32] : memref<8x32xf32, #tpu.memory_space<vmem>>, vector<8x32xf32>
      tpu.vector_store %arg10[%c0_31, %c0_32], %50 {strides = array<i32>} : memref<8x32xf32, #tpu.memory_space<vmem>>, vector<8x32xf32>,
      %52 = vector.extract_strided_slice %49 {offsets = [8, 0], sizes = [8, 32], strides = [1, 1]} : vector<16x32xf32> to vector<8x32xf32>
      %c0_33 = arith.constant 0 : index
      %c0_34 = arith.constant 0 : index
      %53 = vector.load %arg11[%c0_33, %c0_34] : memref<8x32xf32, #tpu.memory_space<vmem>>, vector<8x32xf32>
      tpu.vector_store %arg11[%c0_33, %c0_34], %52 {strides = array<i32>} : memref<8x32xf32, #tpu.memory_space<vmem>>, vector<8x32xf32>,
    } else {
    }
    %c0_4 = arith.constant 0 : index
    %c0_5 = arith.constant 0 : index
    %c0_6 = arith.constant 0 : index
    %5 = vector.load %arg2[%c0_4, %c0_5, %c0_6] : memref<1x8x32xf32, #tpu.memory_space<vmem>>, vector<1x8x32xf32>
    %6 = vector.shape_cast %5 : vector<1x8x32xf32> to vector<8x32xf32>
    %cst = arith.constant dense<0.000000e+00> : vector<8x32xf32>
    %7 = tpu.matmul %6, %0, %cst {dimension_numbers = #tpu.dot_dimension_numbers<[1], [0], [0], [1], [0, 0, 1, 1], [], []>} : vector<8x32xf32>, vector<32x32xf32>, vector<8x32xf32> -> vector<8x32xf32>
    %8 = vector.broadcast %1 : vector<1x32xf32> to vector<8x32xf32>
    %9 = arith.addf %7, %8 : vector<8x32xf32>
    %cst_7 = arith.constant 0.353553385 : f32
    %10 = vector.broadcast %cst_7 : f32 to vector<8x32xf32>
    %11 = arith.mulf %9, %10 : vector<8x32xf32>
    %12 = vector.shape_cast %11 : vector<8x32xf32> to vector<8x4x8xf32>
    %13 = tpu.transpose %12, [1, 0, 2] : vector<8x4x8xf32> -> vector<4x8x8xf32>
    %c0_8 = arith.constant 0 : index
    %c0_9 = arith.constant 0 : index
    %14 = vector.load %arg10[%c0_8, %c0_9] : memref<8x32xf32, #tpu.memory_space<vmem>>, vector<8x32xf32>
    %15 = vector.shape_cast %14 : vector<8x32xf32> to vector<8x4x8xf32>
    %16 = tpu.transpose %15, [1, 0, 2] : vector<8x4x8xf32> -> vector<4x8x8xf32>
    %c0_10 = arith.constant 0 : index
    %c0_11 = arith.constant 0 : index
    %17 = vector.load %arg11[%c0_10, %c0_11] : memref<8x32xf32, #tpu.memory_space<vmem>>, vector<8x32xf32>
    %18 = vector.shape_cast %17 : vector<8x32xf32> to vector<8x4x8xf32>
    %19 = tpu.transpose %18, [1, 0, 2] : vector<8x4x8xf32> -> vector<4x8x8xf32>
    "tpu.trace_start"() <{level = 10 : i32, message = "hqd,hkd->hqk"}> : () -> ()
    %cst_12 = arith.constant dense<0.000000e+00> : vector<4x8x8xf32>
    %20 = tpu.matmul %13, %16, %cst_12 {dimension_numbers = #tpu.dot_dimension_numbers<[2], [2], [1], [1], [0, 0, 0, 1, 1, 1], [0], [0]>} : vector<4x8x8xf32>, vector<4x8x8xf32>, vector<4x8x8xf32> -> vector<4x8x8xf32>
    "tpu.trace_stop"() : () -> ()
    %cst_13 = arith.constant dense<0xFF800000> : vector<4x8xf32>
    %21 = vector.multi_reduction <maximumf>, %20, %cst_13 [2] : vector<4x8x8xf32> to vector<4x8xf32>
    %22 = vector.shape_cast %21 : vector<4x8xf32> to vector<4x8x1xf32>
    %23 = vector.broadcast %22 : vector<4x8x1xf32> to vector<4x8x8xf32>
    %24 = arith.subf %20, %23 : vector<4x8x8xf32>
    %25 = math.exp %24 : vector<4x8x8xf32>
    %cst_14 = arith.constant dense<0.000000e+00> : vector<4x8xf32>
    %26 = vector.multi_reduction <add>, %25, %cst_14 [2] : vector<4x8x8xf32> to vector<4x8xf32>
    %27 = vector.shape_cast %26 : vector<4x8xf32> to vector<4x8x1xf32>
    %28 = tpu.reciprocal %27 {approx = true} : vector<4x8x1xf32> -> vector<4x8x1xf32>
    %29 = vector.broadcast %28 : vector<4x8x1xf32> to vector<4x8x8xf32>
    %30 = arith.mulf %25, %29 : vector<4x8x8xf32>
    "tpu.trace_start"() <{level = 10 : i32, message = "hqk,hkd->hqd"}> : () -> ()
    %cst_15 = arith.constant dense<0.000000e+00> : vector<4x8x8xf32>
    %31 = tpu.matmul %30, %19, %cst_15 {dimension_numbers = #tpu.dot_dimension_numbers<[2], [1], [1], [2], [0, 0, 0, 1, 1, 2], [0], [0]>} : vector<4x8x8xf32>, vector<4x8x8xf32>, vector<4x8x8xf32> -> vector<4x8x8xf32>
    "tpu.trace_stop"() : () -> ()
    %32 = tpu.transpose %31, [1, 0, 2] : vector<4x8x8xf32> -> vector<8x4x8xf32>
    %33 = vector.shape_cast %32 : vector<8x4x8xf32> to vector<8x32xf32>
    %c0_16 = arith.constant 0 : index
    %c0_17 = arith.constant 0 : index
    %34 = vector.load %arg7[%c0_16, %c0_17] : memref<32x32xf32, #tpu.memory_space<vmem>>, vector<32x32xf32>
    %cst_18 = arith.constant dense<0.000000e+00> : vector<8x32xf32>
    %35 = tpu.matmul %33, %34, %cst_18 {dimension_numbers = #tpu.dot_dimension_numbers<[1], [0], [0], [1], [0, 0, 1, 1], [], []>} : vector<8x32xf32>, vector<32x32xf32>, vector<8x32xf32> -> vector<8x32xf32>
    %c0_19 = arith.constant 0 : index
    %c0_20 = arith.constant 0 : index
    %36 = vector.load %arg8[%c0_19, %c0_20] : memref<1x32xf32, #tpu.memory_space<vmem>>, vector<1x32xf32>
    %37 = vector.broadcast %36 : vector<1x32xf32> to vector<8x32xf32>
    %38 = arith.addf %35, %37 : vector<8x32xf32>
    %c0_21 = arith.constant 0 : index
    %c0_22 = arith.constant 0 : index
    %c0_23 = arith.constant 0 : index
    %39 = vector.load %arg9[%c0_21, %c0_22, %c0_23] : memref<1x8x32xf32, #tpu.memory_space<vmem>>, vector<1x8x32xf32>
    %40 = vector.shape_cast %39 : vector<1x8x32xf32> to vector<8x32xf32>
    %41 = vector.shape_cast %38 : vector<8x32xf32> to vector<1x8x32xf32>
    tpu.vector_store %arg9[%c0_21, %c0_22, %c0_23], %41 {strides = array<i32>} : memref<1x8x32xf32, #tpu.memory_space<vmem>>, vector<1x8x32xf32>,
    return
  }
  func.func @transform_0(%arg0: i32, %arg1: i32) -> (i32, i32, i32) {
    %c0_i32 = arith.constant 0 : i32
    %c0_i32_0 = arith.constant 0 : i32
    return %arg0, %arg1, %c0_i32 : i32, i32, i32
  }
  func.func @transform_1(%arg0: i32, %arg1: i32) -> (i32, i32, i32) {
    %c0_i32 = arith.constant 0 : i32
    %c0_i32_0 = arith.constant 0 : i32
    %c0_i32_1 = arith.constant 0 : i32
    return %arg0, %c0_i32, %c0_i32_0 : i32, i32, i32
  }
  func.func @transform_2(%arg0: i32, %arg1: i32) -> (i32, i32, i32) {
    %c0_i32 = arith.constant 0 : i32
    %c0_i32_0 = arith.constant 0 : i32
    %c0_i32_1 = arith.constant 0 : i32
    return %arg0, %c0_i32, %c0_i32_0 : i32, i32, i32
  }
  func.func @transform_3(%arg0: i32, %arg1: i32) -> (i32, i32) {
    %c0_i32 = arith.constant 0 : i32
    %c0_i32_0 = arith.constant 0 : i32
    %c0_i32_1 = arith.constant 0 : i32
    return %c0_i32, %c0_i32_0 : i32, i32
  }
  func.func @transform_4(%arg0: i32, %arg1: i32) -> (i32, i32) {
    %c0_i32 = arith.constant 0 : i32
    %c0_i32_0 = arith.constant 0 : i32
    %c0_i32_1 = arith.constant 0 : i32
    return %c0_i32, %c0_i32_0 : i32, i32
  }
  func.func @transform_5(%arg0: i32, %arg1: i32) -> (i32, i32) {
    %c0_i32 = arith.constant 0 : i32
    %c0_i32_0 = arith.constant 0 : i32
    %c0_i32_1 = arith.constant 0 : i32
    return %c0_i32, %c0_i32_0 : i32, i32
  }
  func.func @transform_6(%arg0: i32, %arg1: i32) -> (i32, i32) {
    %c0_i32 = arith.constant 0 : i32
    %c0_i32_0 = arith.constant 0 : i32
    %c0_i32_1 = arith.constant 0 : i32
    return %c0_i32, %c0_i32_0 : i32, i32
  }
  func.func @transform_7(%arg0: i32, %arg1: i32) -> (i32, i32, i32) {
    %c0_i32 = arith.constant 0 : i32
    %c0_i32_0 = arith.constant 0 : i32
    return %arg0, %arg1, %c0_i32 : i32, i32, i32
  }
}

</mosaic_0001>

<llo_original>
// kernel: tpu_custom_call.1
$region0: #{tpu_custom_call.1}
  #allocation0 [shape = 'u32[]', space=smem, size = 0x4, offset = 0x4, fixed_abs, tag = 'smem constant byte address 0x4 - core index']
  #allocation1 [shape = 'u32[72,128]{1,0:T(1,128)}', space=vmem, size = 0x9000, scoped, tag = 'internal scratch']
  #allocation2 [shape = 'f32[8,32]{1,0:T(8,128)}', space=vmem, size = 0x1000, scoped, tag = 'scratch operand']
  #allocation3 [shape = 'f32[8,32]{1,0:T(8,128)}', space=vmem, size = 0x1000, scoped, tag = 'scratch operand']
  %s0 = inlined_call_operand.hbm [shape: f32[2,8,32], index: 0, kind: input, shape index: {}]
  %s1 = inlined_call_operand.hbm [shape: f32[2,8,32], index: 1, kind: input, shape index: {}]
  %s2 = inlined_call_operand.hbm [shape: f32[2,8,32], index: 2, kind: input, shape index: {}]
  %s3 = inlined_call_operand.hbm [shape: f32[32,32], index: 3, kind: input, shape index: {}]
  %s4 = inlined_call_operand.vmem [shape: f32[1,32], index: 4, kind: input, shape index: {}]
  %s5 = inlined_call_operand.hbm [shape: f32[32,32], index: 5, kind: input, shape index: {}]
  %s6 = inlined_call_operand.vmem [shape: f32[1,32], index: 6, kind: input, shape index: {}]
  %s7 = inlined_call_operand.hbm [shape: f32[2,8,32], index: 7, kind: output, shape index: {}]
  %s8 = sld [smem:[#allocation0]]
  $region85: #{tpu_custom_call.1} parent=0
    _
  %s10 = ssub.s32 1, %s8
  %s11 = scalar_select 0, %s10, %s8
  $region1: #{tpu_custom_call.1} parent=0
    #allocation4 [shape = 'u8[8192]{0}', space=vmem, size = 0x2000, scoped, tag = 'input window, operand 0']
    #allocation5 [shape = 's32[2]{0}', space=sflag, size = 0x8, scoped, tag = 'scoped memory for tpu_custom_call.1']
    #allocation6 [shape = 's32[2]{0}', space=sflag, size = 0x8, scoped, tag = 'scoped memory for tpu_custom_call.1']
    #allocation7 [shape = 'u8[8192]{0}', space=vmem, size = 0x2000, scoped, tag = 'input window, operand 1']
    #allocation8 [shape = 's32[2]{0}', space=sflag, size = 0x8, scoped, tag = 'scoped memory for tpu_custom_call.1']
    #allocation9 [shape = 'u8[8192]{0}', space=vmem, size = 0x2000, scoped, tag = 'input window, operand 2']
    #allocation10 [shape = 'u8[16384]{0}', space=vmem, size = 0x4000, scoped, tag = 'input window, operand 3, single buffered']
    #allocation11 [shape = 's32[1]{0}', space=sflag, size = 0x4, scoped, tag = 'scoped memory for tpu_custom_call.1']
    #allocation12 [shape = 'u8[16384]{0}', space=vmem, size = 0x4000, scoped, tag = 'input window, operand 5, single buffered']
    #allocation13 [shape = 'u8[8192]{0}', space=vmem, size = 0x2000, scoped, tag = 'output window, operand 0']
    %12 = vsyncpa [#allocation5], 0
    %s13 = scalar_lea.sflag [#allocation5], 1
    %14 = vsyncpa %s13, 0
    %15 = vsyncpa [#allocation8], 0
    %s16 = scalar_lea.sflag [#allocation8], 1
    %17 = vsyncpa %s16, 0
    %18 = vsyncpa [#allocation11], 0
    %19 = vsyncpa [#allocation6], 0
    %s20 = scalar_lea.sflag [#allocation6], 1
    %21 = vsyncpa %s20, 0
    loop: start=0, step=1, limit=4
    $region2: #{tpu_custom_call.1} parent=1 // loop_pre_header
      _
    $region3: #{tpu_custom_call.1} parent=1 // loop_header
      %s23 = sphi 0, %s27
      %p24 = scmp.ge.s32.totalorder %s23, 4
      %s30 = sphi 0, %s42
      %s31 = sphi 0, %s38
      %s32 = sphi 0, %s30
      %s33 = sphi 0, %s31
      %s34 = sphi 0, %s32
      %s35 = sphi 0, %s33
      %s47 = sphi 0, %s49
      %s50 = sphi 0, %s47
      %s51 = sphi 0, %s50
      %s67 = sphi 0, %s51
      %s73 = sphi 0, %s75
      %s76 = sphi 0, %s73
      %s77 = sphi 0, %s76
      %s93 = sphi 0, %s77
      %s99 = sphi 0, %s101
      %s102 = sphi 0, %s99
      %s103 = sphi 0, %s102
      %s119 = sphi 0, %s103
      %s123 = sphi 0, %s123
      %s125 = sphi 0, %s123
      %s126 = sphi 0, %s125
      %s140 = sphi 0, %s126
      %s144 = sphi 0, %s144
      %s146 = sphi 0, %s144
      %s147 = sphi 0, %s146
      %s161 = sphi 0, %s147
      %s165 = sphi 0, %s165
      %s167 = sphi 0, %s165
      %s168 = sphi 0, %s167
      %s182 = sphi 0, %s168
      %s186 = sphi 0, %s186
      %s188 = sphi 0, %s186
      %s189 = sphi 0, %s188
      %s203 = sphi 0, %s189
      %s211 = sphi 0, %s213
      %s214 = sphi 0, %s211
      %s215 = sphi 0, %s214
      %s231 = sphi 0, %s215
    $region4: #{tpu_custom_call.1} parent=1 // loop_header_branch
      %26 = sbr.rel (%p24) target = $region8
    $region5: #{tpu_custom_call.1} parent=1 // loop_body
      %s28 = ssub.s32 %s23, 1
      %s29 = ssub.s32 %s23, 2
      %s36 = sadd.s32 1, %s31
      %p37 = scmp.ge.s32.totalorder %s36, 1
      %s38 = scalar_select %p37, 0, %s36
      %s39 = sadd.s32 1, %s30
      %s40 = scalar_select %p37, %s39, %s30
      %p41 = scmp.ge.s32.totalorder %s40, 2
      %s42 = scalar_select %p41, 0, %s40
      %s43 = ssub.s32 %s30, %s42
      %s44 = ssub.s32 %s31, %s38
      %s45 = sor.u32 %s43, %s44
      %p46 = scmp.eq.s32.totalorder %s45, 0
      %s48 = sadd.s32 %s47, 1
      %s49 = scalar_select %p46, %s47, %s48
      %p52 = pneg %p46
      %p53 = scmp.eq.s32.totalorder %s23, 1
      %p54 = por %p52, %p53
      %p55 = scmp.ne.s32.totalorder %s47, %s50
      %p56 = scmp.eq.s32.totalorder %s23, 0
      %p57 = por %p55, %p56
      %p58 = scmp.ne.s32.totalorder %s47, %s50
      %p59 = scmp.eq.s32.totalorder %s28, 1
      %p60 = por %p58, %p59
      %p61 = scmp.ne.s32.totalorder %s50, %s51
      %p62 = scmp.eq.s32.totalorder %s28, 0
      %p63 = por %p61, %p62
      %p64 = scmp.ne.s32.totalorder %s50, %s51
      %p65 = scmp.eq.s32.totalorder %s29, 1
      %p66 = por %p64, %p65
      %p68 = scmp.ne.s32.totalorder %s51, %s67
      %p69 = scmp.eq.s32.totalorder %s29, 0
      %p70 = por %p68, %p69
      %s71 = ssub.s32 %s30, %s42
      %p72 = scmp.eq.s32.totalorder %s71, 0
      %s74 = sadd.s32 %s73, 1
      %s75 = scalar_select %p72, %s73, %s74
      %p78 = pneg %p72
      %p79 = scmp.eq.s32.totalorder %s23, 1
      %p80 = por %p78, %p79
      %p81 = scmp.ne.s32.totalorder %s73, %s76
      %p82 = scmp.eq.s32.totalorder %s23, 0
      %p83 = por %p81, %p82
      %p84 = scmp.ne.s32.totalorder %s73, %s76
      %p85 = scmp.eq.s32.totalorder %s28, 1
      %p86 = por %p84, %p85
      %p87 = scmp.ne.s32.totalorder %s76, %s77
      %p88 = scmp.eq.s32.totalorder %s28, 0
      %p89 = por %p87, %p88
      %p90 = scmp.ne.s32.totalorder %s76, %s77
      %p91 = scmp.eq.s32.totalorder %s29, 1
      %p92 = por %p90, %p91
      %p94 = scmp.ne.s32.totalorder %s77, %s93
      %p95 = scmp.eq.s32.totalorder %s29, 0
      %p96 = por %p94, %p95
      %s97 = ssub.s32 %s30, %s42
      %p98 = scmp.eq.s32.totalorder %s97, 0
      %s100 = sadd.s32 %s99, 1
      %s101 = scalar_select %p98, %s99, %s100
      %p104 = pneg %p98
      %p105 = scmp.eq.s32.totalorder %s23, 1
      %p106 = por %p104, %p105
      %p107 = scmp.ne.s32.totalorder %s99, %s102
      %p108 = scmp.eq.s32.totalorder %s23, 0
      %p109 = por %p107, %p108
      %p110 = scmp.ne.s32.totalorder %s99, %s102
      %p111 = scmp.eq.s32.totalorder %s28, 1
      %p112 = por %p110, %p111
      %p113 = scmp.ne.s32.totalorder %s102, %s103
      %p114 = scmp.eq.s32.totalorder %s28, 0
      %p115 = por %p113, %p114
      %p116 = scmp.ne.s32.totalorder %s102, %s103
      %p117 = scmp.eq.s32.totalorder %s29, 1
      %p118 = por %p116, %p117
      %p120 = scmp.ne.s32.totalorder %s103, %s119
      %p121 = scmp.eq.s32.totalorder %s29, 0
      %p122 = por %p120, %p121
      %s124 = sadd.s32 %s123, 1
      %p127 = scmp.eq.s32.totalorder %s23, 1
      %p128 = scmp.ne.s32.totalorder %s123, %s125
      %p129 = scmp.eq.s32.totalorder %s23, 0
      %p130 = por %p128, %p129
      %p131 = scmp.ne.s32.totalorder %s123, %s125
      %p132 = scmp.eq.s32.totalorder %s28, 1
      %p133 = por %p131, %p132
      %p134 = scmp.ne.s32.totalorder %s125, %s126
      %p135 = scmp.eq.s32.totalorder %s28, 0
      %p136 = por %p134, %p135
      %p137 = scmp.ne.s32.totalorder %s125, %s126
      %p138 = scmp.eq.s32.totalorder %s29, 1
      %p139 = por %p137, %p138
      %p141 = scmp.ne.s32.totalorder %s126, %s140
      %p142 = scmp.eq.s32.totalorder %s29, 0
      %p143 = por %p141, %p142
      %s145 = sadd.s32 %s144, 1
      %p148 = scmp.eq.s32.totalorder %s23, 1
      %p149 = scmp.ne.s32.totalorder %s144, %s146
      %p150 = scmp.eq.s32.totalorder %s23, 0
      %p151 = por %p149, %p150
      %p152 = scmp.ne.s32.totalorder %s144, %s146
      %p153 = scmp.eq.s32.totalorder %s28, 1
      %p154 = por %p152, %p153
      %p155 = scmp.ne.s32.totalorder %s146, %s147
      %p156 = scmp.eq.s32.totalorder %s28, 0
      %p157 = por %p155, %p156
      %p158 = scmp.ne.s32.totalorder %s146, %s147
      %p159 = scmp.eq.s32.totalorder %s29, 1
      %p160 = por %p158, %p159
      %p162 = scmp.ne.s32.totalorder %s147, %s161
      %p163 = scmp.eq.s32.totalorder %s29, 0
      %p164 = por %p162, %p163
      %s166 = sadd.s32 %s165, 1
      %p169 = scmp.eq.s32.totalorder %s23, 1
      %p170 = scmp.ne.s32.totalorder %s165, %s167
      %p171 = scmp.eq.s32.totalorder %s23, 0
      %p172 = por %p170, %p171
      %p173 = scmp.ne.s32.totalorder %s165, %s167
      %p174 = scmp.eq.s32.totalorder %s28, 1
      %p175 = por %p173, %p174
      %p176 = scmp.ne.s32.totalorder %s167, %s168
      %p177 = scmp.eq.s32.totalorder %s28, 0
      %p178 = por %p176, %p177
      %p179 = scmp.ne.s32.totalorder %s167, %s168
      %p180 = scmp.eq.s32.totalorder %s29, 1
      %p181 = por %p179, %p180
      %p183 = scmp.ne.s32.totalorder %s168, %s182
      %p184 = scmp.eq.s32.totalorder %s29, 0
      %p185 = por %p183, %p184
      %s187 = sadd.s32 %s186, 1
      %p190 = scmp.eq.s32.totalorder %s23, 1
      %p191 = scmp.ne.s32.totalorder %s186, %s188
      %p192 = scmp.eq.s32.totalorder %s23, 0
      %p193 = por %p191, %p192
      %p194 = scmp.ne.s32.totalorder %s186, %s188
      %p195 = scmp.eq.s32.totalorder %s28, 1
      %p196 = por %p194, %p195
      %p197 = scmp.ne.s32.totalorder %s188, %s189
      %p198 = scmp.eq.s32.totalorder %s28, 0
      %p199 = por %p197, %p198
      %p200 = scmp.ne.s32.totalorder %s188, %s189
      %p201 = scmp.eq.s32.totalorder %s29, 1
      %p202 = por %p200, %p201
      %p204 = scmp.ne.s32.totalorder %s189, %s203
      %p205 = scmp.eq.s32.totalorder %s29, 0
      %p206 = por %p204, %p205
      %s207 = ssub.s32 %s30, %s42
      %s208 = ssub.s32 %s31, %s38
      %s209 = sor.u32 %s207, %s208
      %p210 = scmp.eq.s32.totalorder %s209, 0
      %s212 = sadd.s32 %s211, 1
      %s213 = scalar_select %p210, %s211, %s212
      %p216 = pneg %p210
      %p217 = scmp.eq.s32.totalorder %s23, 1
      %p218 = por %p216, %p217
      %p219 = scmp.ne.s32.totalorder %s211, %s214
      %p220 = scmp.eq.s32.totalorder %s23, 0
      %p221 = por %p219, %p220
      %p222 = scmp.ne.s32.totalorder %s211, %s214
      %p223 = scmp.eq.s32.totalorder %s28, 1
      %p224 = por %p222, %p223
      %p225 = scmp.ne.s32.totalorder %s214, %s215
      %p226 = scmp.eq.s32.totalorder %s28, 0
      %p227 = por %p225, %p226
      %p228 = scmp.ne.s32.totalorder %s214, %s215
      %p229 = scmp.eq.s32.totalorder %s29, 1
      %p230 = por %p228, %p229
      %p232 = scmp.ne.s32.totalorder %s215, %s231
      %p233 = scmp.eq.s32.totalorder %s29, 0
      %p234 = por %p232, %p233
      %p235 = scmp.le.s32.totalorder 1, %s23
      %p236 = scmp.lt.s32.totalorder %s23, 3
      %p237 = pnand %p235, %p236
      %p238 = pneg %p237
      // Predicated region
      $region9: #{tpu_custom_call.1} parent=5 // pred_check
        _
      $region10: #{tpu_custom_call.1} parent=5 // pred_check_branch
        %240 = sbr.rel (%p237) target = $region12
      $region11: #{tpu_custom_call.1} parent=5 // pred_region
        %s241 = ssub.s32 %s23, 1
        // Predicated region
        $region13: #{tpu_custom_call.1} parent=11 // pred_check
          %p242 = pneg %p136
        $region14: #{tpu_custom_call.1} parent=11 // pred_check_branch
          %244 = sbr.rel (%p242) target = $region16
        $region15: #{tpu_custom_call.1} parent=11 // pred_region
          %246 = vsyncadd [#allocation11], 0
          %s247 = sshll.u32 %s3, 4
          %s248 = int_to_ptr.hbm [resolvable:$true] %s247
          %s249 = sshll.u32 [#allocation10], 4
          %s250 = int_to_ptr.vmem [resolvable:$true] %s249
          %255 = dma.hbm_to_vmem [thread:$0]  %s248, 512, %s250, [#allocation11], 128, 128, 8
        $region16: #{tpu_custom_call.1} parent=11 // pred_fallthru
          _
        // Predicated region
        $region17: #{tpu_custom_call.1} parent=11 // pred_check
          %p256 = pneg %p157
        $region18: #{tpu_custom_call.1} parent=11 // pred_check_branch
          %258 = sbr.rel (%p256) target = $region20
        $region19: #{tpu_custom_call.1} parent=11 // pred_region
          _
        $region20: #{tpu_custom_call.1} parent=11 // pred_fallthru
          _
        // Predicated region
        $region21: #{tpu_custom_call.1} parent=11 // pred_check
          %p259 = pneg %p178
        $region22: #{tpu_custom_call.1} parent=11 // pred_check_branch
          %261 = sbr.rel (%p259) target = $region24
        $region23: #{tpu_custom_call.1} parent=11 // pred_region
          %263 = vsyncadd [#allocation11], 0
          %s264 = sshll.u32 %s5, 4
          %s265 = int_to_ptr.hbm [resolvable:$true] %s264
          %s266 = sshll.u32 [#allocation12], 4
          %s267 = int_to_ptr.vmem [resolvable:$true] %s266
          %272 = dma.hbm_to_vmem [thread:$0]  %s265, 512, %s267, [#allocation11], 128, 128, 8
        $region24: #{tpu_custom_call.1} parent=11 // pred_fallthru
          _
        // Predicated region
        $region25: #{tpu_custom_call.1} parent=11 // pred_check
          %p273 = pneg %p199
        $region26: #{tpu_custom_call.1} parent=11 // pred_check_branch
          %275 = sbr.rel (%p273) target = $region28
        $region27: #{tpu_custom_call.1} parent=11 // pred_region
          _
        $region28: #{tpu_custom_call.1} parent=11 // pred_fallthru
          _
      $region12: #{tpu_custom_call.1} parent=5 // pred_fallthru
        _
      %p276 = scmp.lt.s32.totalorder %s23, 2
      // Predicated region
      $region29: #{tpu_custom_call.1} parent=5 // pred_check
        %p277 = pneg %p276
      $region30: #{tpu_custom_call.1} parent=5 // pred_check_branch
        %279 = sbr.rel (%p277) target = $region32
      $region31: #{tpu_custom_call.1} parent=5 // pred_region
        // Predicated region
        $region33: #{tpu_custom_call.1} parent=31 // pred_check
          %p280 = pneg %p57
        $region34: #{tpu_custom_call.1} parent=31 // pred_check_branch
          %282 = sbr.rel (%p280) target = $region36
        $region35: #{tpu_custom_call.1} parent=31 // pred_region
          %s283 = sand.u32 %s47, 1
          %s284 = scalar_lea.sflag [#allocation5], %s283
          %s285 = sand.u32 %s47, 1
          %s286 = smul.addr %s285, 8
          %s287 = scalar_lea.vmem [#allocation4], %s286
          %289 = vsyncadd %s284, 0
          %s290 = sadd.s32 %s31, %s30
          %s291 = smul.addr %s290, 8
          %s292 = scalar_lea.hbm %s0, %s291
          %s294 = sshll.u32 %s292, 4
          %s295 = int_to_ptr.hbm [resolvable:$true] %s294
          %s296 = sshll.u32 %s287, 4
          %s297 = int_to_ptr.vmem [resolvable:$true] %s296
          %299 = dma.hbm_to_vmem [thread:$0]  %s295, 128, %s297, %s284
        $region36: #{tpu_custom_call.1} parent=31 // pred_fallthru
          _
        // Predicated region
        $region37: #{tpu_custom_call.1} parent=31 // pred_check
          %p300 = pneg %p83
        $region38: #{tpu_custom_call.1} parent=31 // pred_check_branch
          %302 = sbr.rel (%p300) target = $region40
        $region39: #{tpu_custom_call.1} parent=31 // pred_region
          %s303 = sand.u32 %s23, 1
          %s304 = scalar_lea.sflag [#allocation8], %s303
          %s305 = sand.u32 %s73, 1
          %s306 = smul.addr %s305, 8
          %s307 = scalar_lea.vmem [#allocation7], %s306
          %309 = vsyncadd %s304, 0
          %s310 = smul.addr %s30, 8
          %s311 = scalar_lea.hbm %s1, %s310
          %s313 = sshll.u32 %s311, 4
          %s314 = int_to_ptr.hbm [resolvable:$true] %s313
          %s315 = sshll.u32 %s307, 4
          %s316 = int_to_ptr.vmem [resolvable:$true] %s315
          %318 = dma.hbm_to_vmem [thread:$0]  %s314, 128, %s316, %s304
        $region40: #{tpu_custom_call.1} parent=31 // pred_fallthru
          _
        // Predicated region
        $region41: #{tpu_custom_call.1} parent=31 // pred_check
          %p319 = pneg %p109
        $region42: #{tpu_custom_call.1} parent=31 // pred_check_branch
          %321 = sbr.rel (%p319) target = $region44
        $region43: #{tpu_custom_call.1} parent=31 // pred_region
          %s322 = sand.u32 %s23, 1
          %s323 = scalar_lea.sflag [#allocation8], %s322
          %s324 = sand.u32 %s99, 1
          %s325 = smul.addr %s324, 8
          %s326 = scalar_lea.vmem [#allocation9], %s325
          %328 = vsyncadd %s323, 0
          %s329 = smul.addr %s30, 8
          %s330 = scalar_lea.hbm %s2, %s329
          %s332 = sshll.u32 %s330, 4
          %s333 = int_to_ptr.hbm [resolvable:$true] %s332
          %s334 = sshll.u32 %s326, 4
          %s335 = int_to_ptr.vmem [resolvable:$true] %s334
          %337 = dma.hbm_to_vmem [thread:$0]  %s333, 128, %s335, %s323
        $region44: #{tpu_custom_call.1} parent=31 // pred_fallthru
          _
      $region32: #{tpu_custom_call.1} parent=5 // pred_fallthru
        _
      %p338 = scmp.le.s32.totalorder 1, %s23
      %p339 = scmp.lt.s32.totalorder %s23, 3
      %p340 = pnand %p338, %p339
      %p341 = pneg %p340
      // Predicated region
      $region45: #{tpu_custom_call.1} parent=5 // pred_check
        _
      $region46: #{tpu_custom_call.1} parent=5 // pred_check_branch
        %343 = sbr.rel (%p340) target = $region48
      $region47: #{tpu_custom_call.1} parent=5 // pred_region
        %s344 = ssub.s32 %s23, 1
        %s345 = sand.u32 %s50, 1
        %s346 = scalar_lea.sflag [#allocation5], %s345
        %s347 = sand.u32 %s50, 1
        %s348 = smul.addr %s347, 8
        %s349 = scalar_lea.vmem [#allocation4], %s348
        // Predicated region
        $region49: #{tpu_custom_call.1} parent=47 // pred_check
          %p350 = pneg %p63
        $region50: #{tpu_custom_call.1} parent=47 // pred_check_branch
          %352 = sbr.rel (%p350) target = $region52
        $region51: #{tpu_custom_call.1} parent=47 // pred_region
          %354 = dma.done %s346, 128
        $region52: #{tpu_custom_call.1} parent=47 // pred_fallthru
          _
        %s355 = sand.u32 %s28, 1
        %s356 = scalar_lea.sflag [#allocation8], %s355
        %s357 = sand.u32 %s76, 1
        %s358 = smul.addr %s357, 8
        %s359 = scalar_lea.vmem [#allocation7], %s358
        // Predicated region
        $region53: #{tpu_custom_call.1} parent=47 // pred_check
          %p360 = pneg %p89
        $region54: #{tpu_custom_call.1} parent=47 // pred_check_branch
          %362 = sbr.rel (%p360) target = $region56
        $region55: #{tpu_custom_call.1} parent=47 // pred_region
          %364 = dma.done %s356, 128
        $region56: #{tpu_custom_call.1} parent=47 // pred_fallthru
          _
        %s365 = sand.u32 %s28, 1
        %s366 = scalar_lea.sflag [#allocation8], %s365
        %s367 = sand.u32 %s102, 1
        %s368 = smul.addr %s367, 8
        %s369 = scalar_lea.vmem [#allocation9], %s368
        // Predicated region
        $region57: #{tpu_custom_call.1} parent=47 // pred_check
          %p370 = pneg %p115
        $region58: #{tpu_custom_call.1} parent=47 // pred_check_branch
          %372 = sbr.rel (%p370) target = $region60
        $region59: #{tpu_custom_call.1} parent=47 // pred_region
          %374 = dma.done %s366, 128
        $region60: #{tpu_custom_call.1} parent=47 // pred_fallthru
          _
        // Predicated region
        $region61: #{tpu_custom_call.1} parent=47 // pred_check
          %p375 = pneg %p136
        $region62: #{tpu_custom_call.1} parent=47 // pred_check_branch
          %377 = sbr.rel (%p375) target = $region64
        $region63: #{tpu_custom_call.1} parent=47 // pred_region
          %379 = dma.done [#allocation11], 512
        $region64: #{tpu_custom_call.1} parent=47 // pred_fallthru
          _
        // Predicated region
        $region65: #{tpu_custom_call.1} parent=47 // pred_check
          %p380 = pneg %p178
        $region66: #{tpu_custom_call.1} parent=47 // pred_check_branch
          %382 = sbr.rel (%p380) target = $region68
        $region67: #{tpu_custom_call.1} parent=47 // pred_region
          %384 = dma.done [#allocation11], 512
        $region68: #{tpu_custom_call.1} parent=47 // pred_fallthru
          _
        %s385 = sand.u32 %s50, 1
        %s386 = scalar_lea.sflag [#allocation5], %s385
        %s387 = sand.u32 %s50, 1
        %s388 = smul.addr %s387, 8
        %s389 = scalar_lea.vmem [#allocation4], %s388
        %p390 = pneg %p63
        %p391 = pneg %p60
        %s392 = sand.u32 %s28, 1
        %s393 = scalar_lea.sflag [#allocation8], %s392
        %s394 = sand.u32 %s76, 1
        %s395 = smul.addr %s394, 8
        %s396 = scalar_lea.vmem [#allocation7], %s395
        %p397 = pneg %p89
        %p398 = pneg %p86
        %s399 = sand.u32 %s28, 1
        %s400 = scalar_lea.sflag [#allocation8], %s399
        %s401 = sand.u32 %s102, 1
        %s402 = smul.addr %s401, 8
        %s403 = scalar_lea.vmem [#allocation9], %s402
        %p404 = pneg %p115
        %p405 = pneg %p112
        %p406 = pneg %p136
        %p407 = pneg %p133
        %p408 = pneg %p157
        %p409 = pneg %p154
        %p410 = pneg %p178
        %p411 = pneg %p175
        %p412 = pneg %p199
        %p413 = pneg %p196
        %p414 = pneg %p227
        %p415 = pneg %p224
        %s416 = sand.u32 %s214, 1
        %s417 = scalar_lea.sflag [#allocation6], %s416
        %s418 = sand.u32 %s214, 1
        %s419 = smul.addr %s418, 8
        %s420 = scalar_lea.vmem [#allocation13], %s419
        %v421 = vld [vmem:[#allocation10] sm:$0xff]
        %v422 = vld [vmem:[#allocation10 + $0x8] sm:$0xff]
        %v423 = vld [vmem:[#allocation10 + $0x10] sm:$0xff]
        %v424 = vld [vmem:[#allocation10 + $0x18] sm:$0xff]
        %v425 = vld [vmem:[%s4] sm:$0x1]
        %p426 = scmp.eq.s32.totalorder %s33, 0
        // Predicated region
        $region69: #{tpu_custom_call.1} parent=47 // pred_check
          %p427 = pneg %p426
        $region70: #{tpu_custom_call.1} parent=47 // pred_check_branch
          %429 = sbr.rel (%p427) target = $region72
        $region71: #{tpu_custom_call.1} parent=47 // pred_region
          %v430 = vld [vmem:[%s359] sm:$0xff]
          %v431 = vld [vmem:[%s369] sm:$0xff]
          %v433 = vperm.slane %v425, 0
          %vm435 = vcmask 261120
          %v437 = vsel %vm435, %v430, 0
          %v440 = vsel %vm435, %v431, 0
          %442 = vmatpush.msra.mxu0 0.0
          %443 = vmatpush.msra.mxu0 0.0
          %444 = vmatpush.msra.mxu0 0.0
          %445 = vmatpush.msra.mxu0 0.0
          %446 = vmatpush.msra.mxu0 0.0
          %447 = vmatpush.msra.mxu0 0.0
          %448 = vmatpush.msra.mxu0 0.0
          %449 = vmatpush.msra.mxu0 0.0
          %450 = vmatpush.msra.mxu0 0.0
          %451 = vmatpush.msra.mxu0 0.0
          %452 = vmatpush.msra.mxu0 0.0
          %453 = vmatpush.msra.mxu0 0.0
          %454 = vmatpush.msra.mxu0 %v424
          %455 = vmatpush.msra.mxu0 %v423
          %456 = vmatpush.msra.mxu0 %v422
          %457 = vmatpush.msra.mxu0 %v421
          %458 = vmatmul.f32.gmra.mxu0 %v437
          %v459 = vpop.f32.mrf.mxu0
          %v460 = vadd.f32 %v433, %v459
          %461 = vmatmul.f32.gmra.mxu0 %v440
          %v462 = vpop.f32.mrf.mxu0
          %v463 = vadd.f32 %v433, %v462
          %464 = vdwg.mxu0
          %465 = vst.msk [vmem:[#allocation2] sm:$0xff] %vm435, %v460
          %466 = vst.msk [vmem:[#allocation3] sm:$0xff] %vm435, %v463
        $region72: #{tpu_custom_call.1} parent=47 // pred_fallthru
          _
        %v467 = vld [vmem:[%s349] sm:$0xff]
        %v469 = vperm.slane %v425, 0
        %vm471 = vcmask 261120
        %v473 = vsel %vm471, %v467, 0
        %475 = vmatpush.msra.mxu0 0.0
        %476 = vmatpush.msra.mxu0 0.0
        %477 = vmatpush.msra.mxu0 0.0
        %478 = vmatpush.msra.mxu0 0.0
        %479 = vmatpush.msra.mxu0 0.0
        %480 = vmatpush.msra.mxu0 0.0
        %481 = vmatpush.msra.mxu0 0.0
        %482 = vmatpush.msra.mxu0 0.0
        %483 = vmatpush.msra.mxu0 0.0
        %484 = vmatpush.msra.mxu0 0.0
        %485 = vmatpush.msra.mxu0 0.0
        %486 = vmatpush.msra.mxu0 0.0
        %487 = vmatpush.msra.mxu0 %v424
        %488 = vmatpush.msra.mxu0 %v423
        %489 = vmatpush.msra.mxu0 %v422
        %490 = vmatpush.msra.mxu0 %v421
        %491 = vmatmul.f32.gmra.mxu0 %v473
        %v492 = vpop.f32.mrf.mxu0
        %v493 = vadd.f32 %v469, %v492
        %494 = vdwg.mxu0
        %v495 = vmul.f32 %v493, 0.35355338
        %497 = vrot.lane.b32.xlu0 %v495, 120
        %v498 = vpop.permute.xlu0 %497
        %500 = vrot.lane.b32.xlu0 %v495, 112
        %v501 = vpop.permute.xlu0 %500
        %503 = vrot.lane.b32.xlu0 %v495, 104
        %v504 = vpop.permute.xlu0 %503
        %v506 = vrot.slane %v501, 4
        %vm507 = vcmask 1047556
        %v508 = vsel %vm507, %v506, %v495
        %v509 = vrot.slane %v495, 4
        %v510 = vsel %vm507, %v501, %v509
        %v512 = vunpack.c.l.s4 1983009808
        %v513 = vunpack.c.0.s8 %v512
        %v514 = vperm.slane %v508, %v513
        %v516 = vunpack.c.l.s4 1983009808
        %v517 = vunpack.c.0.s8 %v516
        %v518 = vperm.slane %v510, %v517
        %v519 = vrot.slane %v504, 4
        %v520 = vsel %vm507, %v519, %v498
        %v521 = vrot.slane %v498, 4
        %v522 = vsel %vm507, %v504, %v521
        %v524 = vunpack.c.l.s4 1983009808
        %v525 = vunpack.c.0.s8 %v524
        %v526 = vperm.slane %v520, %v525
        %v528 = vunpack.c.l.s4 1983009808
        %v529 = vunpack.c.0.s8 %v528
        %v530 = vperm.slane %v522, %v529
        %v531 = vrot.slane %v526, 4
        %v532 = vsel %vm507, %v531, %v514
        %v533 = vrot.slane %v514, 4
        %v534 = vsel %vm507, %v526, %v533
        %v536 = vunpack.c.l.s4 1934713408
        %v537 = vunpack.c.0.s8 %v536
        %v538 = vperm.slane %v532, %v537
        %v540 = vunpack.c.l.s4 1934713408
        %v541 = vunpack.c.0.s8 %v540
        %v542 = vperm.slane %v534, %v541
        %v543 = vrot.slane %v530, 4
        %v544 = vsel %vm507, %v543, %v518
        %v545 = vrot.slane %v518, 4
        %v546 = vsel %vm507, %v530, %v545
        %v548 = vunpack.c.l.s4 1934713408
        %v549 = vunpack.c.0.s8 %v548
        %v550 = vperm.slane %v544, %v549
        %v552 = vunpack.c.l.s4 1934713408
        %v553 = vunpack.c.0.s8 %v552
        %v554 = vperm.slane %v546, %v553
        %v555 = vrot.slane %v538, 4
        %v556 = vsel %vm507, 0.0, %v555
        %v557 = vrot.slane %v542, 4
        %v558 = vsel %vm507, 0.0, %v557
        %v559 = vrot.slane %v550, 4
        %v560 = vsel %vm507, 0.0, %v559
        %v561 = vrot.slane %v554, 4
        %v562 = vsel %vm507, 0.0, %v561
        %v563 = vsel %vm507, %v557, %v538
        %v565 = vunpack.c.l.s4 1983009808
        %v566 = vunpack.c.0.s8 %v565
        %v567 = vperm.slane %v563, %v566
        %v568 = vrot.slane %v558, 4
        %v569 = vsel %vm507, %v568, %v556
        %v571 = vunpack.c.l.s4 1983009808
        %v572 = vunpack.c.0.s8 %v571
        %v573 = vperm.slane %v569, %v572
        %v574 = vsel %vm507, %v561, %v550
        %v576 = vunpack.c.l.s4 1983009808
        %v577 = vunpack.c.0.s8 %v576
        %v578 = vperm.slane %v574, %v577
        %v579 = vrot.slane %v562, 4
        %v580 = vsel %vm507, %v579, %v560
        %v582 = vunpack.c.l.s4 1983009808
        %v583 = vunpack.c.0.s8 %v582
        %v584 = vperm.slane %v580, %v583
        %v585 = vrot.slane %v573, 4
        %v586 = vsel %vm507, %v585, %v567
        %v587 = vrot.slane %v567, 4
        %v588 = vsel %vm507, %v573, %v587
        %v590 = vunpack.c.l.s4 1934713408
        %v591 = vunpack.c.0.s8 %v590
        %v592 = vperm.slane %v586, %v591
        %v594 = vunpack.c.l.s4 1934713408
        %v595 = vunpack.c.0.s8 %v594
        %v596 = vperm.slane %v588, %v595
        %v597 = vrot.slane %v584, 4
        %v598 = vsel %vm507, %v597, %v578
        %v599 = vrot.slane %v578, 4
        %v600 = vsel %vm507, %v584, %v599
        %v602 = vunpack.c.l.s4 1934713408
        %v603 = vunpack.c.0.s8 %v602
        %v604 = vperm.slane %v598, %v603
        %v606 = vunpack.c.l.s4 1934713408
        %v607 = vunpack.c.0.s8 %v606
        %v608 = vperm.slane %v600, %v607
        %v609 = vrot.slane %v604, 4
        %v610 = vsel %vm507, %v609, %v592
        %v611 = vrot.slane %v592, 4
        %v612 = vsel %vm507, %v604, %v611
        %v613 = vrot.slane %v608, 4
        %v614 = vsel %vm507, %v613, %v596
        %v615 = vrot.slane %v596, 4
        %v616 = vsel %vm507, %v608, %v615
        %v617 = vld [vmem:[#allocation2] sm:$0xff]
        %619 = vrot.lane.b32.xlu0 %v617, 120
        %v620 = vpop.permute.xlu0 %619
        %622 = vrot.lane.b32.xlu0 %v617, 112
        %v623 = vpop.permute.xlu0 %622
        %625 = vrot.lane.b32.xlu0 %v617, 104
        %v626 = vpop.permute.xlu0 %625
        %v628 = vrot.slane %v623, 4
        %v629 = vsel %vm507, %v628, %v617
        %v630 = vrot.slane %v617, 4
        %v631 = vsel %vm507, %v623, %v630
        %v633 = vunpack.c.l.s4 1983009808
        %v634 = vunpack.c.0.s8 %v633
        %v635 = vperm.slane %v629, %v634
        %v637 = vunpack.c.l.s4 1983009808
        %v638 = vunpack.c.0.s8 %v637
        %v639 = vperm.slane %v631, %v638
        %v640 = vrot.slane %v626, 4
        %v641 = vsel %vm507, %v640, %v620
        %v642 = vrot.slane %v620, 4
        %v643 = vsel %vm507, %v626, %v642
        %v645 = vunpack.c.l.s4 1983009808
        %v646 = vunpack.c.0.s8 %v645
        %v647 = vperm.slane %v641, %v646
        %v649 = vunpack.c.l.s4 1983009808
        %v650 = vunpack.c.0.s8 %v649
        %v651 = vperm.slane %v643, %v650
        %v652 = vrot.slane %v647, 4
        %v653 = vsel %vm507, %v652, %v635
        %v654 = vrot.slane %v635, 4
        %v655 = vsel %vm507, %v647, %v654
        %v657 = vunpack.c.l.s4 1934713408
        %v658 = vunpack.c.0.s8 %v657
        %v659 = vperm.slane %v653, %v658
        %v661 = vunpack.c.l.s4 1934713408
        %v662 = vunpack.c.0.s8 %v661
        %v663 = vperm.slane %v655, %v662
        %v664 = vrot.slane %v651, 4
        %v665 = vsel %vm507, %v664, %v639
        %v666 = vrot.slane %v639, 4
        %v667 = vsel %vm507, %v651, %v666
        %v669 = vunpack.c.l.s4 1934713408
        %v670 = vunpack.c.0.s8 %v669
        %v671 = vperm.slane %v665, %v670
        %v673 = vunpack.c.l.s4 1934713408
        %v674 = vunpack.c.0.s8 %v673
        %v675 = vperm.slane %v667, %v674
        %v676 = vrot.slane %v659, 4
        %v677 = vsel %vm507, 0.0, %v676
        %v678 = vrot.slane %v663, 4
        %v679 = vsel %vm507, 0.0, %v678
        %v680 = vrot.slane %v671, 4
        %v681 = vsel %vm507, 0.0, %v680
        %v682 = vrot.slane %v675, 4
        %v683 = vsel %vm507, 0.0, %v682
        %v684 = vsel %vm507, %v678, %v659
        %v686 = vunpack.c.l.s4 1983009808
        %v687 = vunpack.c.0.s8 %v686
        %v688 = vperm.slane %v684, %v687
        %v689 = vrot.slane %v679, 4
        %v690 = vsel %vm507, %v689, %v677
        %v692 = vunpack.c.l.s4 1983009808
        %v693 = vunpack.c.0.s8 %v692
        %v694 = vperm.slane %v690, %v693
        %v695 = vsel %vm507, %v682, %v671
        %v697 = vunpack.c.l.s4 1983009808
        %v698 = vunpack.c.0.s8 %v697
        %v699 = vperm.slane %v695, %v698
        %v700 = vrot.slane %v683, 4
        %v701 = vsel %vm507, %v700, %v681
        %v703 = vunpack.c.l.s4 1983009808
        %v704 = vunpack.c.0.s8 %v703
        %v705 = vperm.slane %v701, %v704
        %v706 = vrot.slane %v694, 4
        %v707 = vsel %vm507, %v706, %v688
        %v708 = vrot.slane %v688, 4
        %v709 = vsel %vm507, %v694, %v708
        %v711 = vunpack.c.l.s4 1934713408
        %v712 = vunpack.c.0.s8 %v711
        %v713 = vperm.slane %v707, %v712
        %v715 = vunpack.c.l.s4 1934713408
        %v716 = vunpack.c.0.s8 %v715
        %v717 = vperm.slane %v709, %v716
        %v718 = vrot.slane %v705, 4
        %v719 = vsel %vm507, %v718, %v699
        %v720 = vrot.slane %v699, 4
        %v721 = vsel %vm507, %v705, %v720
        %v723 = vunpack.c.l.s4 1934713408
        %v724 = vunpack.c.0.s8 %v723
        %v725 = vperm.slane %v719, %v724
        %v727 = vunpack.c.l.s4 1934713408
        %v728 = vunpack.c.0.s8 %v727
        %v729 = vperm.slane %v721, %v728
        %v730 = vrot.slane %v725, 4
        %v731 = vsel %vm507, %v730, %v713
        %v732 = vrot.slane %v713, 4
        %v733 = vsel %vm507, %v725, %v732
        %v734 = vrot.slane %v729, 4
        %v735 = vsel %vm507, %v734, %v717
        %v736 = vrot.slane %v717, 4
        %v737 = vsel %vm507, %v729, %v736
        %v738 = vld [vmem:[#allocation3] sm:$0xff]
        %740 = vrot.lane.b32.xlu0 %v738, 120
        %v741 = vpop.permute.xlu0 %740
        %743 = vrot.lane.b32.xlu0 %v738, 112
        %v744 = vpop.permute.xlu0 %743
        %746 = vrot.lane.b32.xlu0 %v738, 104
        %v747 = vpop.permute.xlu0 %746
        %v749 = vrot.slane %v744, 4
        %v750 = vsel %vm507, %v749, %v738
        %v751 = vrot.slane %v738, 4
        %v752 = vsel %vm507, %v744, %v751
        %v754 = vunpack.c.l.s4 1983009808
        %v755 = vunpack.c.0.s8 %v754
        %v756 = vperm.slane %v750, %v755
        %v758 = vunpack.c.l.s4 1983009808
        %v759 = vunpack.c.0.s8 %v758
        %v760 = vperm.slane %v752, %v759
        %v761 = vrot.slane %v747, 4
        %v762 = vsel %vm507, %v761, %v741
        %v763 = vrot.slane %v741, 4
        %v764 = vsel %vm507, %v747, %v763
        %v766 = vunpack.c.l.s4 1983009808
        %v767 = vunpack.c.0.s8 %v766
        %v768 = vperm.slane %v762, %v767
        %v770 = vunpack.c.l.s4 1983009808
        %v771 = vunpack.c.0.s8 %v770
        %v772 = vperm.slane %v764, %v771
        %v773 = vrot.slane %v768, 4
        %v774 = vsel %vm507, %v773, %v756
        %v775 = vrot.slane %v756, 4
        %v776 = vsel %vm507, %v768, %v775
        %v778 = vunpack.c.l.s4 1934713408
        %v779 = vunpack.c.0.s8 %v778
        %v780 = vperm.slane %v774, %v779
        %v782 = vunpack.c.l.s4 1934713408
        %v783 = vunpack.c.0.s8 %v782
        %v784 = vperm.slane %v776, %v783
        %v785 = vrot.slane %v772, 4
        %v786 = vsel %vm507, %v785, %v760
        %v787 = vrot.slane %v760, 4
        %v788 = vsel %vm507, %v772, %v787
        %v790 = vunpack.c.l.s4 1934713408
        %v791 = vunpack.c.0.s8 %v790
        %v792 = vperm.slane %v786, %v791
        %v794 = vunpack.c.l.s4 1934713408
        %v795 = vunpack.c.0.s8 %v794
        %v796 = vperm.slane %v788, %v795
        %v797 = vrot.slane %v780, 4
        %v798 = vsel %vm507, 0.0, %v797
        %v799 = vrot.slane %v784, 4
        %v800 = vsel %vm507, 0.0, %v799
        %v801 = vrot.slane %v792, 4
        %v802 = vsel %vm507, 0.0, %v801
        %v803 = vrot.slane %v796, 4
        %v804 = vsel %vm507, 0.0, %v803
        %v805 = vsel %vm507, %v799, %v780
        %v807 = vunpack.c.l.s4 1983009808
        %v808 = vunpack.c.0.s8 %v807
        %v809 = vperm.slane %v805, %v808
        %v810 = vrot.slane %v800, 4
        %v811 = vsel %vm507, %v810, %v798
        %v813 = vunpack.c.l.s4 1983009808
        %v814 = vunpack.c.0.s8 %v813
        %v815 = vperm.slane %v811, %v814
        %v816 = vsel %vm507, %v803, %v792
        %v818 = vunpack.c.l.s4 1983009808
        %v819 = vunpack.c.0.s8 %v818
        %v820 = vperm.slane %v816, %v819
        %v821 = vrot.slane %v804, 4
        %v822 = vsel %vm507, %v821, %v802
        %v824 = vunpack.c.l.s4 1983009808
        %v825 = vunpack.c.0.s8 %v824
        %v826 = vperm.slane %v822, %v825
        %v827 = vrot.slane %v815, 4
        %v828 = vsel %vm507, %v827, %v809
        %v829 = vrot.slane %v809, 4
        %v830 = vsel %vm507, %v815, %v829
        %v832 = vunpack.c.l.s4 1934713408
        %v833 = vunpack.c.0.s8 %v832
        %v834 = vperm.slane %v828, %v833
        %v836 = vunpack.c.l.s4 1934713408
        %v837 = vunpack.c.0.s8 %v836
        %v838 = vperm.slane %v830, %v837
        %v839 = vrot.slane %v826, 4
        %v840 = vsel %vm507, %v839, %v820
        %v841 = vrot.slane %v820, 4
        %v842 = vsel %vm507, %v826, %v841
        %v844 = vunpack.c.l.s4 1934713408
        %v845 = vunpack.c.0.s8 %v844
        %v846 = vperm.slane %v840, %v845
        %v848 = vunpack.c.l.s4 1934713408
        %v849 = vunpack.c.0.s8 %v848
        %v850 = vperm.slane %v842, %v849
        %v851 = vrot.slane %v846, 4
        %v852 = vsel %vm507, %v851, %v834
        %v853 = vrot.slane %v834, 4
        %v854 = vsel %vm507, %v846, %v853
        %v855 = vrot.slane %v850, 4
        %v856 = vsel %vm507, %v855, %v838
        %v857 = vrot.slane %v838, 4
        %v858 = vsel %vm507, %v850, %v857
        %vm859 = vcmask 64512
        %v861 = vsel %vm859, %v610, 0
        %v864 = vsel %vm859, %v731, 0
        %866 = vmatpush.xpose.msra.mxu0 0.0
        %867 = vmatpush.xpose.msra.mxu0 0.0
        %868 = vmatpush.xpose.msra.mxu0 0.0
        %869 = vmatpush.xpose.msra.mxu0 0.0
        %870 = vmatpush.xpose.msra.mxu0 0.0
        %871 = vmatpush.xpose.msra.mxu0 0.0
        %872 = vmatpush.xpose.msra.mxu0 0.0
        %873 = vmatpush.xpose.msra.mxu0 0.0
        %874 = vmatpush.xpose.msra.mxu0 0.0
        %875 = vmatpush.xpose.msra.mxu0 0.0
        %876 = vmatpush.xpose.msra.mxu0 0.0
        %877 = vmatpush.xpose.msra.mxu0 0.0
        %878 = vmatpush.xpose.msra.mxu0 0.0
        %879 = vmatpush.xpose.msra.mxu0 0.0
        %880 = vmatpush.xpose.msra.mxu0 0.0
        %881 = vmatpush.xpose.msra.mxu0 %v864
        %882 = vmatmul.f32.gmra.mxu0 %v861
        %v883 = vpop.f32.mrf.mxu0
        %v884 = vadd.f32 0.0, %v883
        %885 = vdwg.mxu0
        %v887 = vsel %vm859, %v612, 0
        %v890 = vsel %vm859, %v733, 0
        %892 = vmatpush.xpose.msra.mxu0 0.0
        %893 = vmatpush.xpose.msra.mxu0 0.0
        %894 = vmatpush.xpose.msra.mxu0 0.0
        %895 = vmatpush.xpose.msra.mxu0 0.0
        %896 = vmatpush.xpose.msra.mxu0 0.0
        %897 = vmatpush.xpose.msra.mxu0 0.0
        %898 = vmatpush.xpose.msra.mxu0 0.0
        %899 = vmatpush.xpose.msra.mxu0 0.0
        %900 = vmatpush.xpose.msra.mxu0 0.0
        %901 = vmatpush.xpose.msra.mxu0 0.0
        %902 = vmatpush.xpose.msra.mxu0 0.0
        %903 = vmatpush.xpose.msra.mxu0 0.0
        %904 = vmatpush.xpose.msra.mxu0 0.0
        %905 = vmatpush.xpose.msra.mxu0 0.0
        %906 = vmatpush.xpose.msra.mxu0 0.0
        %907 = vmatpush.xpose.msra.mxu0 %v890
        %908 = vmatmul.f32.gmra.mxu0 %v887
        %v909 = vpop.f32.mrf.mxu0
        %v910 = vadd.f32 0.0, %v909
        %911 = vdwg.mxu0
        %v913 = vsel %vm859, %v614, 0
        %v916 = vsel %vm859, %v735, 0
        %918 = vmatpush.xpose.msra.mxu0 0.0
        %919 = vmatpush.xpose.msra.mxu0 0.0
        %920 = vmatpush.xpose.msra.mxu0 0.0
        %921 = vmatpush.xpose.msra.mxu0 0.0
        %922 = vmatpush.xpose.msra.mxu0 0.0
        %923 = vmatpush.xpose.msra.mxu0 0.0
        %924 = vmatpush.xpose.msra.mxu0 0.0
        %925 = vmatpush.xpose.msra.mxu0 0.0
        %926 = vmatpush.xpose.msra.mxu0 0.0
        %927 = vmatpush.xpose.msra.mxu0 0.0
        %928 = vmatpush.xpose.msra.mxu0 0.0
        %929 = vmatpush.xpose.msra.mxu0 0.0
        %930 = vmatpush.xpose.msra.mxu0 0.0
        %931 = vmatpush.xpose.msra.mxu0 0.0
        %932 = vmatpush.xpose.msra.mxu0 0.0
        %933 = vmatpush.xpose.msra.mxu0 %v916
        %934 = vmatmul.f32.gmra.mxu0 %v913
        %v935 = vpop.f32.mrf.mxu0
        %v936 = vadd.f32 0.0, %v935
        %937 = vdwg.mxu0
        %v939 = vsel %vm859, %v616, 0
        %v942 = vsel %vm859, %v737, 0
        %944 = vmatpush.xpose.msra.mxu0 0.0
        %945 = vmatpush.xpose.msra.mxu0 0.0
        %946 = vmatpush.xpose.msra.mxu0 0.0
        %947 = vmatpush.xpose.msra.mxu0 0.0
        %948 = vmatpush.xpose.msra.mxu0 0.0
        %949 = vmatpush.xpose.msra.mxu0 0.0
        %950 = vmatpush.xpose.msra.mxu0 0.0
        %951 = vmatpush.xpose.msra.mxu0 0.0
        %952 = vmatpush.xpose.msra.mxu0 0.0
        %953 = vmatpush.xpose.msra.mxu0 0.0
        %954 = vmatpush.xpose.msra.mxu0 0.0
        %955 = vmatpush.xpose.msra.mxu0 0.0
        %956 = vmatpush.xpose.msra.mxu0 0.0
        %957 = vmatpush.xpose.msra.mxu0 0.0
        %958 = vmatpush.xpose.msra.mxu0 0.0
        %959 = vmatpush.xpose.msra.mxu0 %v942
        %960 = vmatmul.f32.gmra.mxu0 %v939
        %v961 = vpop.f32.mrf.mxu0
        %v962 = vadd.f32 0.0, %v961
        %963 = vdwg.mxu0
        %v964 = vsel %vm859, %v884, -inf
        %965 = vmax.xlane.f32.xlu0 %v964
        %v966 = vpop.xlane.xlu0 %965
        %v967 = vsel %vm859, %v910, -inf
        %968 = vmax.xlane.f32.xlu0 %v967
        %v969 = vpop.xlane.xlu0 %968
        %v970 = vsel %vm859, %v936, -inf
        %971 = vmax.xlane.f32.xlu0 %v970
        %v972 = vpop.xlane.xlu0 %971
        %v973 = vsel %vm859, %v962, -inf
        %974 = vmax.xlane.f32.xlu0 %v973
        %v975 = vpop.xlane.xlu0 %974
        %v976 = vsub.f32 %v884, %v966
        %v977 = vsub.f32 %v910, %v969
        %v978 = vsub.f32 %v936, %v972
        %v979 = vsub.f32 %v962, %v975
        %v980 = vmul.f32 %v976, 1.442695
        %v981 = vpow.pop %v980
        %v982 = vmul.f32 %v977, 1.442695
        %v983 = vpow.pop %v982
        %v984 = vmul.f32 %v978, 1.442695
        %v985 = vpow.pop %v984
        %v986 = vmul.f32 %v979, 1.442695
        %v987 = vpow.pop %v986
        %v988 = vsel %vm859, %v981, 0.0
        %989 = vadd.xlane.f32.xlu0 %v988
        %v990 = vpop.xlane.xlu0 %989
        %v991 = vsel %vm859, %v983, 0.0
        %992 = vadd.xlane.f32.xlu0 %v991
        %v993 = vpop.xlane.xlu0 %992
        %v994 = vsel %vm859, %v985, 0.0
        %995 = vadd.xlane.f32.xlu0 %v994
        %v996 = vpop.xlane.xlu0 %995
        %v997 = vsel %vm859, %v987, 0.0
        %998 = vadd.xlane.f32.xlu0 %v997
        %v999 = vpop.xlane.xlu0 %998
        %v1000 = vrcp.pop %v990
        %v1001 = vrcp.pop %v993
        %v1002 = vrcp.pop %v996
        %v1003 = vrcp.pop %v999
        %v1004 = vmul.f32 %v981, %v1000
        %v1005 = vmul.f32 %v983, %v1001
        %v1006 = vmul.f32 %v985, %v1002
        %v1007 = vmul.f32 %v987, %v1003
        %v1009 = vsel %vm859, %v1004, 0
        %1011 = vmatpush.msra.mxu0 0.0
        %1012 = vmatpush.msra.mxu0 0.0
        %1013 = vmatpush.msra.mxu0 0.0
        %1014 = vmatpush.msra.mxu0 0.0
        %1015 = vmatpush.msra.mxu0 0.0
        %1016 = vmatpush.msra.mxu0 0.0
        %1017 = vmatpush.msra.mxu0 0.0
        %1018 = vmatpush.msra.mxu0 0.0
        %1019 = vmatpush.msra.mxu0 0.0
        %1020 = vmatpush.msra.mxu0 0.0
        %1021 = vmatpush.msra.mxu0 0.0
        %1022 = vmatpush.msra.mxu0 0.0
        %1023 = vmatpush.msra.mxu0 0.0
        %1024 = vmatpush.msra.mxu0 0.0
        %1025 = vmatpush.msra.mxu0 0.0
        %1026 = vmatpush.msra.mxu0 %v852
        %1027 = vmatmul.f32.gmra.mxu0 %v1009
        %v1028 = vpop.f32.mrf.mxu0
        %v1029 = vadd.f32 0.0, %v1028
        %1030 = vdwg.mxu0
        %v1032 = vsel %vm859, %v1005, 0
        %1034 = vmatpush.msra.mxu0 0.0
        %1035 = vmatpush.msra.mxu0 0.0
        %1036 = vmatpush.msra.mxu0 0.0
        %1037 = vmatpush.msra.mxu0 0.0
        %1038 = vmatpush.msra.mxu0 0.0
        %1039 = vmatpush.msra.mxu0 0.0
        %1040 = vmatpush.msra.mxu0 0.0
        %1041 = vmatpush.msra.mxu0 0.0
        %1042 = vmatpush.msra.mxu0 0.0
        %1043 = vmatpush.msra.mxu0 0.0
        %1044 = vmatpush.msra.mxu0 0.0
        %1045 = vmatpush.msra.mxu0 0.0
        %1046 = vmatpush.msra.mxu0 0.0
        %1047 = vmatpush.msra.mxu0 0.0
        %1048 = vmatpush.msra.mxu0 0.0
        %1049 = vmatpush.msra.mxu0 %v854
        %1050 = vmatmul.f32.gmra.mxu0 %v1032
        %v1051 = vpop.f32.mrf.mxu0
        %v1052 = vadd.f32 0.0, %v1051
        %1053 = vdwg.mxu0
        %v1055 = vsel %vm859, %v1006, 0
        %1057 = vmatpush.msra.mxu0 0.0
        %1058 = vmatpush.msra.mxu0 0.0
        %1059 = vmatpush.msra.mxu0 0.0
        %1060 = vmatpush.msra.mxu0 0.0
        %1061 = vmatpush.msra.mxu0 0.0
        %1062 = vmatpush.msra.mxu0 0.0
        %1063 = vmatpush.msra.mxu0 0.0
        %1064 = vmatpush.msra.mxu0 0.0
        %1065 = vmatpush.msra.mxu0 0.0
        %1066 = vmatpush.msra.mxu0 0.0
        %1067 = vmatpush.msra.mxu0 0.0
        %1068 = vmatpush.msra.mxu0 0.0
        %1069 = vmatpush.msra.mxu0 0.0
        %1070 = vmatpush.msra.mxu0 0.0
        %1071 = vmatpush.msra.mxu0 0.0
        %1072 = vmatpush.msra.mxu0 %v856
        %1073 = vmatmul.f32.gmra.mxu0 %v1055
        %v1074 = vpop.f32.mrf.mxu0
        %v1075 = vadd.f32 0.0, %v1074
        %1076 = vdwg.mxu0
        %v1078 = vsel %vm859, %v1007, 0
        %1080 = vmatpush.msra.mxu0 0.0
        %1081 = vmatpush.msra.mxu0 0.0
        %1082 = vmatpush.msra.mxu0 0.0
        %1083 = vmatpush.msra.mxu0 0.0
        %1084 = vmatpush.msra.mxu0 0.0
        %1085 = vmatpush.msra.mxu0 0.0
        %1086 = vmatpush.msra.mxu0 0.0
        %1087 = vmatpush.msra.mxu0 0.0
        %1088 = vmatpush.msra.mxu0 0.0
        %1089 = vmatpush.msra.mxu0 0.0
        %1090 = vmatpush.msra.mxu0 0.0
        %1091 = vmatpush.msra.mxu0 0.0
        %1092 = vmatpush.msra.mxu0 0.0
        %1093 = vmatpush.msra.mxu0 0.0
        %1094 = vmatpush.msra.mxu0 0.0
        %1095 = vmatpush.msra.mxu0 %v858
        %1096 = vmatmul.f32.gmra.mxu0 %v1078
        %v1097 = vpop.f32.mrf.mxu0
        %v1098 = vadd.f32 0.0, %v1097
        %1099 = vdwg.mxu0
        %v1100 = vrot.slane %v1075, 4
        %v1101 = vsel %vm507, %v1100, %v1029
        %v1102 = vrot.slane %v1029, 4
        %v1103 = vsel %vm507, %v1075, %v1102
        %v1105 = vunpack.c.l.s4 1983009808
        %v1106 = vunpack.c.0.s8 %v1105
        %v1107 = vperm.slane %v1101, %v1106
        %v1109 = vunpack.c.l.s4 1983009808
        %v1110 = vunpack.c.0.s8 %v1109
        %v1111 = vperm.slane %v1103, %v1110
        %v1112 = vrot.slane %v1098, 4
        %v1113 = vsel %vm507, %v1112, %v1052
        %v1114 = vrot.slane %v1052, 4
        %v1115 = vsel %vm507, %v1098, %v1114
        %v1117 = vunpack.c.l.s4 1983009808
        %v1118 = vunpack.c.0.s8 %v1117
        %v1119 = vperm.slane %v1113, %v1118
        %v1121 = vunpack.c.l.s4 1983009808
        %v1122 = vunpack.c.0.s8 %v1121
        %v1123 = vperm.slane %v1115, %v1122
        %v1124 = vrot.slane %v1119, 4
        %v1125 = vsel %vm507, %v1124, %v1107
        %v1126 = vrot.slane %v1107, 4
        %v1127 = vsel %vm507, %v1119, %v1126
        %v1129 = vunpack.c.l.s4 1934713408
        %v1130 = vunpack.c.0.s8 %v1129
        %v1131 = vperm.slane %v1125, %v1130
        %v1133 = vunpack.c.l.s4 1934713408
        %v1134 = vunpack.c.0.s8 %v1133
        %v1135 = vperm.slane %v1127, %v1134
        %v1136 = vrot.slane %v1123, 4
        %v1137 = vsel %vm507, %v1136, %v1111
        %v1138 = vrot.slane %v1111, 4
        %v1139 = vsel %vm507, %v1123, %v1138
        %v1141 = vunpack.c.l.s4 1934713408
        %v1142 = vunpack.c.0.s8 %v1141
        %v1143 = vperm.slane %v1137, %v1142
        %v1145 = vunpack.c.l.s4 1934713408
        %v1146 = vunpack.c.0.s8 %v1145
        %v1147 = vperm.slane %v1139, %v1146
        %v1148 = vrot.slane %v1131, 4
        %v1149 = vsel %vm507, 0.0, %v1148
        %v1150 = vrot.slane %v1135, 4
        %v1151 = vsel %vm507, 0.0, %v1150
        %v1152 = vrot.slane %v1143, 4
        %v1153 = vsel %vm507, 0.0, %v1152
        %v1154 = vrot.slane %v1147, 4
        %v1155 = vsel %vm507, 0.0, %v1154
        %v1156 = vsel %vm507, %v1150, %v1131
        %v1158 = vunpack.c.l.s4 1983009808
        %v1159 = vunpack.c.0.s8 %v1158
        %v1160 = vperm.slane %v1156, %v1159
        %v1161 = vrot.slane %v1151, 4
        %v1162 = vsel %vm507, %v1161, %v1149
        %v1164 = vunpack.c.l.s4 1983009808
        %v1165 = vunpack.c.0.s8 %v1164
        %v1166 = vperm.slane %v1162, %v1165
        %v1167 = vsel %vm507, %v1154, %v1143
        %v1169 = vunpack.c.l.s4 1983009808
        %v1170 = vunpack.c.0.s8 %v1169
        %v1171 = vperm.slane %v1167, %v1170
        %v1172 = vrot.slane %v1155, 4
        %v1173 = vsel %vm507, %v1172, %v1153
        %v1175 = vunpack.c.l.s4 1983009808
        %v1176 = vunpack.c.0.s8 %v1175
        %v1177 = vperm.slane %v1173, %v1176
        %v1178 = vrot.slane %v1166, 4
        %v1179 = vsel %vm507, %v1178, %v1160
        %v1180 = vrot.slane %v1160, 4
        %v1181 = vsel %vm507, %v1166, %v1180
        %v1183 = vunpack.c.l.s4 1934713408
        %v1184 = vunpack.c.0.s8 %v1183
        %v1185 = vperm.slane %v1179, %v1184
        %v1187 = vunpack.c.l.s4 1934713408
        %v1188 = vunpack.c.0.s8 %v1187
        %v1189 = vperm.slane %v1181, %v1188
        %v1190 = vrot.slane %v1177, 4
        %v1191 = vsel %vm507, %v1190, %v1171
        %v1192 = vrot.slane %v1171, 4
        %v1193 = vsel %vm507, %v1177, %v1192
        %v1195 = vunpack.c.l.s4 1934713408
        %v1196 = vunpack.c.0.s8 %v1195
        %v1197 = vperm.slane %v1191, %v1196
        %v1199 = vunpack.c.l.s4 1934713408
        %v1200 = vunpack.c.0.s8 %v1199
        %v1201 = vperm.slane %v1193, %v1200
        %v1202 = vrot.slane %v1197, 4
        %v1203 = vsel %vm507, %v1202, %v1185
        %v1204 = vrot.slane %v1185, 4
        %v1205 = vsel %vm507, %v1197, %v1204
        %v1206 = vrot.slane %v1201, 4
        %v1207 = vsel %vm507, %v1206, %v1189
        %v1208 = vrot.slane %v1189, 4
        %v1209 = vsel %vm507, %v1201, %v1208
        %1211 = vrot.lane.b32.xlu0 %v1205, 8
        %v1212 = vpop.permute.xlu0 %1211
        %1215 = vrot.lane.b32.xlu0 %v1207, 16
        %v1216 = vpop.permute.xlu0 %1215
        %1219 = vrot.lane.b32.xlu0 %v1209, 24
        %v1220 = vpop.permute.xlu0 %1219
        %v1222 = vsel %vm859, %v1203, %v1212
        %vm1223 = vcmask 130048
        %v1224 = vsel %vm1223, %v1222, %v1216
        %vm1225 = vcmask 195584
        %v1226 = vsel %vm1225, %v1224, %v1220
        %v1227 = vld [vmem:[#allocation12] sm:$0xff]
        %v1228 = vld [vmem:[#allocation12 + $0x8] sm:$0xff]
        %v1229 = vld [vmem:[#allocation12 + $0x10] sm:$0xff]
        %v1230 = vld [vmem:[#allocation12 + $0x18] sm:$0xff]
        %v1231 = vld [vmem:[%s6] sm:$0x1]
        %v1233 = vperm.slane %v1231, 0
        %v1236 = vsel %vm471, %v1226, 0
        %1238 = vmatpush.msra.mxu0 0.0
        %1239 = vmatpush.msra.mxu0 0.0
        %1240 = vmatpush.msra.mxu0 0.0
        %1241 = vmatpush.msra.mxu0 0.0
        %1242 = vmatpush.msra.mxu0 0.0
        %1243 = vmatpush.msra.mxu0 0.0
        %1244 = vmatpush.msra.mxu0 0.0
        %1245 = vmatpush.msra.mxu0 0.0
        %1246 = vmatpush.msra.mxu0 0.0
        %1247 = vmatpush.msra.mxu0 0.0
        %1248 = vmatpush.msra.mxu0 0.0
        %1249 = vmatpush.msra.mxu0 0.0
        %1250 = vmatpush.msra.mxu0 %v1230
        %1251 = vmatpush.msra.mxu0 %v1229
        %1252 = vmatpush.msra.mxu0 %v1228
        %1253 = vmatpush.msra.mxu0 %v1227
        %1254 = vmatmul.f32.gmra.mxu0 %v1236
        %v1255 = vpop.f32.mrf.mxu0
        %v1256 = vadd.f32 %v1233, %v1255
        %1257 = vdwg.mxu0
        %1258 = vst.msk [vmem:[%s420] sm:$0xff] %vm471, %v1256
        %s1259 = sand.u32 %s214, 1
        %s1260 = scalar_lea.sflag [#allocation6], %s1259
        %s1261 = sand.u32 %s214, 1
        %s1262 = smul.addr %s1261, 8
        %s1263 = scalar_lea.vmem [#allocation13], %s1262
        // Predicated region
        $region73: #{tpu_custom_call.1} parent=47 // pred_check
          %p1264 = pneg %p224
        $region74: #{tpu_custom_call.1} parent=47 // pred_check_branch
          %1266 = sbr.rel (%p1264) target = $region76
        $region75: #{tpu_custom_call.1} parent=47 // pred_region
          %1268 = vsyncadd %s1260, 0
          %s1269 = sadd.s32 %s33, %s32
          %s1270 = smul.addr %s1269, 8
          %s1271 = scalar_lea.hbm %s7, %s1270
          %s1273 = sshll.u32 %s1263, 4
          %s1274 = int_to_ptr.vmem [resolvable:$true] %s1273
          %s1275 = sshll.u32 %s1271, 4
          %s1276 = int_to_ptr.hbm [resolvable:$true] %s1275
          %1278 = dma.vmem_to_hbm [thread:$0]  %s1274, 128, %s1276, %s1260
        $region76: #{tpu_custom_call.1} parent=47 // pred_fallthru
          _
      $region48: #{tpu_custom_call.1} parent=5 // pred_fallthru
        _
      %p1279 = scmp.le.s32.totalorder 2, %s23
      // Predicated region
      $region77: #{tpu_custom_call.1} parent=5 // pred_check
        %p1280 = pneg %p1279
      $region78: #{tpu_custom_call.1} parent=5 // pred_check_branch
        %1282 = sbr.rel (%p1280) target = $region80
      $region79: #{tpu_custom_call.1} parent=5 // pred_region
        %s1283 = ssub.s32 %s23, 2
        // Predicated region
        $region81: #{tpu_custom_call.1} parent=79 // pred_check
          %p1284 = pneg %p230
        $region82: #{tpu_custom_call.1} parent=79 // pred_check_branch
          %1286 = sbr.rel (%p1284) target = $region84
        $region83: #{tpu_custom_call.1} parent=79 // pred_region
          %s1287 = sand.u32 %s215, 1
          %s1288 = scalar_lea.sflag [#allocation6], %s1287
          %s1289 = sand.u32 %s215, 1
          %s1290 = smul.addr %s1289, 8
          %s1291 = scalar_lea.vmem [#allocation13], %s1290
          %1293 = dma.done %s1288, 128
        $region84: #{tpu_custom_call.1} parent=79 // pred_fallthru
          _
      $region80: #{tpu_custom_call.1} parent=5 // pred_fallthru
        _
    $region6: #{tpu_custom_call.1} parent=1 // loop_footer
      %s27 = sadd.s32 1, %s23
    $region7: #{tpu_custom_call.1} parent=1 // loop_footer_branch
      %22 = sbr.rel target = $region3
    $region8: #{tpu_custom_call.1} parent=1 // loop_exit
      _
    %1294 = vsyncpa [#allocation5], 1
    %s1295 = scalar_lea.sflag [#allocation5], 1
    %1296 = vsyncpa %s1295, 1
    %1297 = vsyncpa [#allocation8], 1
    %s1298 = scalar_lea.sflag [#allocation8], 1
    %1299 = vsyncpa %s1298, 1
    %1300 = vsyncpa [#allocation11], 1
    %1301 = vsyncpa [#allocation6], 1
    %s1302 = scalar_lea.sflag [#allocation6], 1
    %1303 = vsyncpa %s1302, 1

</llo_original>
